<compile_context>
chip_gen: v5e
topology: v5e:2x2
jax: 0.10.0
libtpu: 0.0.40
codegen_flags: <defaults>
</compile_context>

<pallas_src>
import jax
import jax.numpy as jnp
from jax import lax
from jax.experimental import pallas as pl
from jax.experimental.pallas import tpu as pltpu


def _vmem_limit_bytes(*block_nbytes, scratch_nbytes=0):
    est = 2 * sum(block_nbytes) + scratch_nbytes      # 2x = double buffering
    est = 2 * est + (8 << 20)                         # acc / temporaries slack
    return int(min(max(est, 32 << 20), 64 << 20))     # never above v7x physical


# ---------------------------------------------------------------------------
# Path A: small C (< 128).  Layout (B, H, W*C) -> lane dim is W*C (lane dense).
# ---------------------------------------------------------------------------
def _make_flat_kernel(C):
    def kernel(x_ref, w_ref, b_ref, o_ref, xs_ref):
        # x_ref : (1, H, W*C)  image with W and C folded into the lane dim
        # w_ref : (9, W*C)     per-tap flat weights, W-edge wrap pre-masked
        # b_ref : (1, W*C)     bias tiled along W
        # o_ref : (1, H, W*C)
        # xs_ref: (H+2, W*C)   VMEM scratch: image with zero halo rows (H pad)
        H, WC = o_ref.shape[1], o_ref.shape[2]

        # Build the H-padded copy entirely in VMEM (no HBM round trip).
        xs_ref[0:1, :] = jnp.zeros((1, WC), xs_ref.dtype)
        xs_ref[H + 1:H + 2, :] = jnp.zeros((1, WC), xs_ref.dtype)
        xs_ref[1:H + 1, :] = x_ref[0, :, :]

        w = w_ref[...].astype(jnp.float32)                        # cast once
        # Bias folded into accumulator init.
        acc = jnp.broadcast_to(b_ref[...].astype(jnp.float32), (H, WC))

        for dh in range(3):
            row = xs_ref[dh:dh + H, :].astype(jnp.float32)        # reused 3x
            for dw in range(3):
                if dw == 1:
                    tap = row
                else:
                    # dw shift == roll by C lanes; wrapped lanes are already
                    # zeroed in the pre-masked flat weights (== zero padding).
                    tap = pltpu.roll(row, shift=((1 - dw) * C) % WC, axis=1)
                k = 3 * dh + dw
                acc = acc + tap * w[k:k + 1, :]
        o_ref[0, :, :] = acc.astype(o_ref.dtype)

    return kernel


def _dwconv_flat(x, weight, bias, H, W):
    B, N, C = x.shape
    WC = W * C
    x_flat = x.reshape(B, H, WC)

    # w_flat[3*dh+dw, w*C+c] = weight[dh, dw, c], with the wrap taps
    # (w==0 for dw==0, w==W-1 for dw==2) zeroed.
    wmask = jnp.ones((3, W), weight.dtype)
    wmask = wmask.at[0, 0].set(0).at[2, W - 1].set(0)
    w_flat = (weight[:, :, None, :] * wmask[None, :, :, None]).reshape(9, WC)
    b_flat = jnp.tile(bias, W).reshape(1, WC)

    bpe = x.dtype.itemsize
    vmem = _vmem_limit_bytes(
        H * WC * bpe, 9 * WC * w_flat.dtype.itemsize, WC * b_flat.dtype.itemsize,
        H * WC * bpe, scratch_nbytes=(H + 2) * WC * bpe)

    out = pl.pallas_call(
        _make_flat_kernel(C),
        out_shape=jax.ShapeDtypeStruct((B, H, WC), x.dtype),
        grid_spec=pltpu.PrefetchScalarGridSpec(
            num_scalar_prefetch=0,
            grid=(B,),
            in_specs=[
                pl.BlockSpec((1, H, WC), lambda b: (b, 0, 0)),
                pl.BlockSpec((9, WC), lambda b: (0, 0)),
                pl.BlockSpec((1, WC), lambda b: (0, 0)),
            ],
            out_specs=pl.BlockSpec((1, H, WC), lambda b: (b, 0, 0)),
            scratch_shapes=[pltpu.VMEM((H + 2, WC), x.dtype)],
        ),
        compiler_params=pltpu.CompilerParams(
            dimension_semantics=("parallel",),
            vmem_limit_bytes=vmem),
    )(x_flat, w_flat, b_flat)
    return out.reshape(B, N, C)


# ---------------------------------------------------------------------------
# Path B: C % 128 == 0.  NHWC with a channel-tile grid axis (lane dim = Ct).
# ---------------------------------------------------------------------------
def _nhwc_kernel(x_ref, w_ref, b_ref, o_ref, xs_ref):
    # x_ref : (1, H, W, Ct); w_ref: (3, 3, Ct); b_ref: (1, 1, Ct)
    # o_ref : (1, H, W, Ct); xs_ref: (H+2, W+2, Ct) zero-halo scratch
    H, W, Ct = o_ref.shape[1], o_ref.shape[2], o_ref.shape[3]

    xs_ref[0:1, :, :] = jnp.zeros((1, W + 2, Ct), xs_ref.dtype)
    xs_ref[H + 1:H + 2, :, :] = jnp.zeros((1, W + 2, Ct), xs_ref.dtype)
    xs_ref[1:H + 1, 0:1, :] = jnp.zeros((H, 1, Ct), xs_ref.dtype)
    xs_ref[1:H + 1, W + 1:W + 2, :] = jnp.zeros((H, 1, Ct), xs_ref.dtype)
    xs_ref[1:H + 1, 1:W + 1, :] = x_ref[0, :, :, :]

    w = w_ref[...].astype(jnp.float32)                            # cast once
    acc = jnp.broadcast_to(b_ref[...].astype(jnp.float32), (H, W, Ct))
    for dh in range(3):
        rows = xs_ref[dh:dh + H, :, :].astype(jnp.float32)        # reused 3x
        for dw in range(3):
            acc = acc + rows[:, dw:dw + W, :] * w[dh:dh + 1, dw:dw + 1, :]
    o_ref[0, :, :, :] = acc.astype(o_ref.dtype)


def _dwconv_nhwc(x, weight, bias, H, W, ct=128):
    B, N, C = x.shape
    assert C % ct == 0
    x_nhwc = x.reshape(B, H, W, C)
    b3 = bias.reshape(1, 1, C)

    bpe = x.dtype.itemsize
    vmem = _vmem_limit_bytes(
        H * W * ct * bpe, 9 * ct * weight.dtype.itemsize, ct * bias.dtype.itemsize,
        H * W * ct * bpe, scratch_nbytes=(H + 2) * (W + 2) * ct * bpe)

    out = pl.pallas_call(
        _nhwc_kernel,
        out_shape=jax.ShapeDtypeStruct((B, H, W, C), x.dtype),
        grid_spec=pltpu.PrefetchScalarGridSpec(
            num_scalar_prefetch=0,
            grid=(B, C // ct),
            in_specs=[
                pl.BlockSpec((1, H, W, ct), lambda b, c: (b, 0, 0, c)),
                pl.BlockSpec((3, 3, ct), lambda b, c: (0, 0, c)),
                pl.BlockSpec((1, 1, ct), lambda b, c: (0, 0, c)),
            ],
            out_specs=pl.BlockSpec((1, H, W, ct), lambda b, c: (b, 0, 0, c)),
            scratch_shapes=[pltpu.VMEM((H + 2, W + 2, ct), x.dtype)],
        ),
        compiler_params=pltpu.CompilerParams(
            dimension_semantics=("parallel", "parallel"),
            vmem_limit_bytes=vmem),
    )(x_nhwc, weight, b3)
    return out.reshape(B, N, C)


def dwconv(x, weight, bias, H, W):
    """DWConv forward: x (B, N=H*W, C), weight (3, 3, C), bias (C,) -> (B, N, C)."""
    B, N, C = x.shape
    assert N == H * W
    if C % 128 == 0:
        return _dwconv_nhwc(x, weight, bias, H, W)
    return _dwconv_flat(x, weight, bias, H, W)
    # TODO(synk): add an H-tiled variant (overlapping halo blocks) for very
    # large H*W*C images; current paths keep the full image per grid step.


def dwconv_ref(x, weight, bias, H, W):
    """Pure-JAX reference replicating the PyTorch forward exactly (NCHW path)."""
    B, N, C = x.shape
    x_nchw = jnp.transpose(x, (0, 2, 1)).reshape(B, C, H, W)
    w_oihw = jnp.transpose(weight, (2, 0, 1))[:, None, :, :]   # (C, 1, 3, 3)
    y = lax.conv_general_dilated(
        x_nchw, w_oihw,
        window_strides=(1, 1),
        padding=((1, 1), (1, 1)),
        feature_group_count=C,
        dimension_numbers=('NCHW', 'OIHW', 'NCHW'),
        precision=lax.Precision.HIGHEST)
    y = y + bias[None, :, None, None]
    return jnp.transpose(y.reshape(B, C, N), (0, 2, 1))


if __name__ == "__main__":
    def run_case(B, C, H, W, key):
        kx, kw, kb = jax.random.split(key, 3)
        N = H * W
        x = jax.random.normal(kx, (B, N, C), dtype=jnp.float32)
        # Conv2d(dim, dim, 3, groups=dim, bias=True): fan_in = 1*3*3
        bound = 1.0 / jnp.sqrt(9.0)
        weight = jax.random.uniform(kw, (3, 3, C), jnp.float32, -bound, bound)
        bias = jax.random.uniform(kb, (C,), jnp.float32, -bound, bound)

        out = jax.block_until_ready(dwconv(x, weight, bias, H, W))
        ref = dwconv_ref(x, weight, bias, H, W)
        assert out.shape == (B, N, C)
        assert jnp.allclose(out, ref, atol=1e-5, rtol=1e-5), \
            f"mismatch vs reference (B={B}, C={C}, H={H}, W={W})"

    key = jax.random.PRNGKey(0)
    k1, k2 = jax.random.split(key)
    run_case(2, 16, 16, 16, k1)    # lane-dense flat path (C < 128)
    run_case(2, 256, 8, 8, k2)     # channel-tiled NHWC path (C % 128 == 0)

    print("KERNEL_OK")
</pallas_src>

<mosaic_0001>
module attributes {stable_mosaic.version = 11 : i64} {
  func.func @kernel(%arg0: i32, %arg1: memref<1x16x256xf32, #tpu.memory_space<vmem>>, %arg2: memref<9x256xf32, #tpu.memory_space<vmem>>, %arg3: memref<1x256xf32, #tpu.memory_space<vmem>>, %arg4: memref<1x16x256xf32, #tpu.memory_space<vmem>>, %arg5: memref<18x256xf32, #tpu.memory_space<vmem>>) attributes {dimension_semantics = [#tpu.dimension_semantics<parallel>], iteration_bounds = array<i64: 2>, scalar_prefetch = 0 : i64, scratch_operands = 1 : i64, tpu.core_type = #tpu.core_type<tc>, window_params = [{transform_indices = @transform_0, window_bounds = array<i64: 1, 16, 256>}, {pipeline_mode = #tpu.pipeline_mode<synchronous>, transform_indices = @transform_1, window_bounds = array<i64: 9, 256>}, {pipeline_mode = #tpu.pipeline_mode<synchronous>, transform_indices = @transform_2, window_bounds = array<i64: 1, 256>}, {transform_indices = @transform_3, window_bounds = array<i64: 1, 16, 256>}]} {
    %cst = arith.constant 0.000000e+00 : f32
    %0 = vector.broadcast %cst : f32 to vector<1x256xf32>
    %c0 = arith.constant 0 : index
    %c0_0 = arith.constant 0 : index
    %1 = vector.load %arg5[%c0, %c0_0] : memref<18x256xf32, #tpu.memory_space<vmem>>, vector<1x256xf32>
    tpu.vector_store %arg5[%c0, %c0_0], %0 {strides = array<i32>} : memref<18x256xf32, #tpu.memory_space<vmem>>, vector<1x256xf32>,
    %cst_1 = arith.constant 0.000000e+00 : f32
    %2 = vector.broadcast %cst_1 : f32 to vector<1x256xf32>
    %c17 = arith.constant 17 : index
    %c0_2 = arith.constant 0 : index
    %3 = vector.load %arg5[%c17, %c0_2] : memref<18x256xf32, #tpu.memory_space<vmem>>, vector<1x256xf32>
    tpu.vector_store %arg5[%c17, %c0_2], %2 {strides = array<i32>} : memref<18x256xf32, #tpu.memory_space<vmem>>, vector<1x256xf32>,
    %c0_3 = arith.constant 0 : index
    %c0_4 = arith.constant 0 : index
    %c0_5 = arith.constant 0 : index
    %4 = vector.load %arg1[%c0_3, %c0_4, %c0_5] : memref<1x16x256xf32, #tpu.memory_space<vmem>>, vector<1x16x256xf32>
    %5 = vector.shape_cast %4 : vector<1x16x256xf32> to vector<16x256xf32>
    %c1 = arith.constant 1 : index
    %c0_6 = arith.constant 0 : index
    %6 = vector.load %arg5[%c1, %c0_6] : memref<18x256xf32, #tpu.memory_space<vmem>>, vector<16x256xf32>
    tpu.vector_store %arg5[%c1, %c0_6], %5 {strides = array<i32>} : memref<18x256xf32, #tpu.memory_space<vmem>>, vector<16x256xf32>,
    %c0_7 = arith.constant 0 : index
    %c0_8 = arith.constant 0 : index
    %7 = vector.load %arg2[%c0_7, %c0_8] : memref<9x256xf32, #tpu.memory_space<vmem>>, vector<9x256xf32>
    %c0_9 = arith.constant 0 : index
    %c0_10 = arith.constant 0 : index
    %8 = vector.load %arg3[%c0_9, %c0_10] : memref<1x256xf32, #tpu.memory_space<vmem>>, vector<1x256xf32>
    %9 = vector.shape_cast %8 : vector<1x256xf32> to vector<1x256xf32>
    %10 = vector.broadcast %9 : vector<1x256xf32> to vector<16x256xf32>
    %c0_11 = arith.constant 0 : index
    %c0_12 = arith.constant 0 : index
    %11 = vector.load %arg5[%c0_11, %c0_12] : memref<18x256xf32, #tpu.memory_space<vmem>>, vector<16x256xf32>
    %c16_i32 = arith.constant 16 : i32
    %12 = tpu.dynamic_rotate %11 by %c16_i32 dim 1 : vector<16x256xf32>, i32 -> vector<16x256xf32>
    %13 = vector.extract_strided_slice %7 {offsets = [0, 0], sizes = [1, 256], strides = [1, 1]} : vector<9x256xf32> to vector<1x256xf32>
    %14 = vector.broadcast %13 : vector<1x256xf32> to vector<16x256xf32>
    %15 = arith.mulf %12, %14 : vector<16x256xf32>
    %16 = arith.addf %10, %15 : vector<16x256xf32>
    %17 = vector.extract_strided_slice %7 {offsets = [1, 0], sizes = [1, 256], strides = [1, 1]} : vector<9x256xf32> to vector<1x256xf32>
    %18 = vector.broadcast %17 : vector<1x256xf32> to vector<16x256xf32>
    %19 = arith.mulf %11, %18 : vector<16x256xf32>
    %20 = arith.addf %16, %19 : vector<16x256xf32>
    %c240_i32 = arith.constant 240 : i32
    %21 = tpu.dynamic_rotate %11 by %c240_i32 dim 1 : vector<16x256xf32>, i32 -> vector<16x256xf32>
    %22 = vector.extract_strided_slice %7 {offsets = [2, 0], sizes = [1, 256], strides = [1, 1]} : vector<9x256xf32> to vector<1x256xf32>
    %23 = vector.broadcast %22 : vector<1x256xf32> to vector<16x256xf32>
    %24 = arith.mulf %21, %23 : vector<16x256xf32>
    %25 = arith.addf %20, %24 : vector<16x256xf32>
    %c1_13 = arith.constant 1 : index
    %c0_14 = arith.constant 0 : index
    %26 = vector.load %arg5[%c1_13, %c0_14] : memref<18x256xf32, #tpu.memory_space<vmem>>, vector<16x256xf32>
    %c16_i32_15 = arith.constant 16 : i32
    %27 = tpu.dynamic_rotate %26 by %c16_i32_15 dim 1 : vector<16x256xf32>, i32 -> vector<16x256xf32>
    %28 = vector.extract_strided_slice %7 {offsets = [3, 0], sizes = [1, 256], strides = [1, 1]} : vector<9x256xf32> to vector<1x256xf32>
    %29 = vector.broadcast %28 : vector<1x256xf32> to vector<16x256xf32>
    %30 = arith.mulf %27, %29 : vector<16x256xf32>
    %31 = arith.addf %25, %30 : vector<16x256xf32>
    %32 = vector.extract_strided_slice %7 {offsets = [4, 0], sizes = [1, 256], strides = [1, 1]} : vector<9x256xf32> to vector<1x256xf32>
    %33 = vector.broadcast %32 : vector<1x256xf32> to vector<16x256xf32>
    %34 = arith.mulf %26, %33 : vector<16x256xf32>
    %35 = arith.addf %31, %34 : vector<16x256xf32>
    %c240_i32_16 = arith.constant 240 : i32
    %36 = tpu.dynamic_rotate %26 by %c240_i32_16 dim 1 : vector<16x256xf32>, i32 -> vector<16x256xf32>
    %37 = vector.extract_strided_slice %7 {offsets = [5, 0], sizes = [1, 256], strides = [1, 1]} : vector<9x256xf32> to vector<1x256xf32>
    %38 = vector.broadcast %37 : vector<1x256xf32> to vector<16x256xf32>
    %39 = arith.mulf %36, %38 : vector<16x256xf32>
    %40 = arith.addf %35, %39 : vector<16x256xf32>
    %c2 = arith.constant 2 : index
    %c0_17 = arith.constant 0 : index
    %41 = vector.load %arg5[%c2, %c0_17] : memref<18x256xf32, #tpu.memory_space<vmem>>, vector<16x256xf32>
    %c16_i32_18 = arith.constant 16 : i32
    %42 = tpu.dynamic_rotate %41 by %c16_i32_18 dim 1 : vector<16x256xf32>, i32 -> vector<16x256xf32>
    %43 = vector.extract_strided_slice %7 {offsets = [6, 0], sizes = [1, 256], strides = [1, 1]} : vector<9x256xf32> to vector<1x256xf32>
    %44 = vector.broadcast %43 : vector<1x256xf32> to vector<16x256xf32>
    %45 = arith.mulf %42, %44 : vector<16x256xf32>
    %46 = arith.addf %40, %45 : vector<16x256xf32>
    %47 = vector.extract_strided_slice %7 {offsets = [7, 0], sizes = [1, 256], strides = [1, 1]} : vector<9x256xf32> to vector<1x256xf32>
    %48 = vector.broadcast %47 : vector<1x256xf32> to vector<16x256xf32>
    %49 = arith.mulf %41, %48 : vector<16x256xf32>
    %50 = arith.addf %46, %49 : vector<16x256xf32>
    %c240_i32_19 = arith.constant 240 : i32
    %51 = tpu.dynamic_rotate %41 by %c240_i32_19 dim 1 : vector<16x256xf32>, i32 -> vector<16x256xf32>
    %52 = vector.extract_strided_slice %7 {offsets = [8, 0], sizes = [1, 256], strides = [1, 1]} : vector<9x256xf32> to vector<1x256xf32>
    %53 = vector.broadcast %52 : vector<1x256xf32> to vector<16x256xf32>
    %54 = arith.mulf %51, %53 : vector<16x256xf32>
    %55 = arith.addf %50, %54 : vector<16x256xf32>
    %c0_20 = arith.constant 0 : index
    %c0_21 = arith.constant 0 : index
    %c0_22 = arith.constant 0 : index
    %56 = vector.load %arg4[%c0_20, %c0_21, %c0_22] : memref<1x16x256xf32, #tpu.memory_space<vmem>>, vector<1x16x256xf32>
    %57 = vector.shape_cast %56 : vector<1x16x256xf32> to vector<16x256xf32>
    %58 = vector.shape_cast %55 : vector<16x256xf32> to vector<1x16x256xf32>
    tpu.vector_store %arg4[%c0_20, %c0_21, %c0_22], %58 {strides = array<i32>} : memref<1x16x256xf32, #tpu.memory_space<vmem>>, vector<1x16x256xf32>,
    return
  }
  func.func @transform_0(%arg0: i32) -> (i32, i32, i32) {
    %c0_i32 = arith.constant 0 : i32
    %c0_i32_0 = arith.constant 0 : i32
    %c0_i32_1 = arith.constant 0 : i32
    return %arg0, %c0_i32, %c0_i32_0 : i32, i32, i32
  }
  func.func @transform_1(%arg0: i32) -> (i32, i32) {
    %c0_i32 = arith.constant 0 : i32
    %c0_i32_0 = arith.constant 0 : i32
    %c0_i32_1 = arith.constant 0 : i32
    return %c0_i32, %c0_i32_0 : i32, i32
  }
  func.func @transform_2(%arg0: i32) -> (i32, i32) {
    %c0_i32 = arith.constant 0 : i32
    %c0_i32_0 = arith.constant 0 : i32
    %c0_i32_1 = arith.constant 0 : i32
    return %c0_i32, %c0_i32_0 : i32, i32
  }
  func.func @transform_3(%arg0: i32) -> (i32, i32, i32) {
    %c0_i32 = arith.constant 0 : i32
    %c0_i32_0 = arith.constant 0 : i32
    %c0_i32_1 = arith.constant 0 : i32
    return %arg0, %c0_i32, %c0_i32_0 : i32, i32, i32
  }
}

</mosaic_0001>

<llo_original>
// kernel: tpu_custom_call.1
$region0: #{tpu_custom_call.1}
  #allocation0 [shape = 'u32[]', space=smem, size = 0x4, offset = 0x4, fixed_abs, tag = 'smem constant byte address 0x4 - core index']
  #allocation1 [shape = 'u32[72,128]{1,0:T(1,128)}', space=vmem, size = 0x9000, scoped, tag = 'internal scratch']
  #allocation2 [shape = 'f32[18,256]{1,0:T(8,128)}', space=vmem, size = 0x6000, scoped, tag = 'scratch operand']
  %s0 = inlined_call_operand.hbm [shape: f32[2,16,256], index: 0, kind: input, shape index: {}]
  %s1 = inlined_call_operand.hbm [shape: f32[9,256], index: 1, kind: input, shape index: {}]
  %s2 = inlined_call_operand.hbm [shape: f32[1,256], index: 2, kind: input, shape index: {}]
  %s3 = inlined_call_operand.hbm [shape: f32[2,16,256], index: 3, kind: output, shape index: {}]
  %s4 = sld [smem:[#allocation0]]
  $region57: #{tpu_custom_call.1} parent=0
    _
  %s6 = ssub.s32 1, %s4
  %s7 = scalar_select 0, %s6, %s4
  $region1: #{tpu_custom_call.1} parent=0
    #allocation3 [shape = 'u8[32768]{0}', space=vmem, size = 0x8000, scoped, tag = 'input window, operand 0']
    #allocation4 [shape = 's32[2]{0}', space=sflag, size = 0x8, scoped, tag = 'scoped memory for tpu_custom_call.1']
    #allocation5 [shape = 's32[2]{0}', space=sflag, size = 0x8, scoped, tag = 'scoped memory for tpu_custom_call.1']
    #allocation6 [shape = 'u8[16384]{0}', space=vmem, size = 0x4000, scoped, tag = 'input window, operand 1, single buffered']
    #allocation7 [shape = 's32[1]{0}', space=sflag, size = 0x4, scoped, tag = 'scoped memory for tpu_custom_call.1']
    #allocation8 [shape = 'u8[1024]{0}', space=vmem, size = 0x400, scoped, tag = 'input window, operand 2, single buffered']
    #allocation9 [shape = 'u8[32768]{0}', space=vmem, size = 0x8000, scoped, tag = 'output window, operand 0']
    %8 = vsyncpa [#allocation4], 0
    %s9 = scalar_lea.sflag [#allocation4], 1
    %10 = vsyncpa %s9, 0
    %11 = vsyncpa [#allocation7], 0
    %12 = vsyncpa [#allocation5], 0
    %s13 = scalar_lea.sflag [#allocation5], 1
    %14 = vsyncpa %s13, 0
    loop: start=0, step=1, limit=4
    $region2: #{tpu_custom_call.1} parent=1 // loop_pre_header
      _
    $region3: #{tpu_custom_call.1} parent=1 // loop_header
      %s16 = sphi 0, %s20
      %p17 = scmp.ge.s32.totalorder %s16, 4
      %s26 = sphi 0, %s28
      %s29 = sphi 0, %s26
      %s30 = sphi 0, %s29
      %s46 = sphi 0, %s30
      %s50 = sphi 0, %s50
      %s52 = sphi 0, %s50
      %s53 = sphi 0, %s52
      %s67 = sphi 0, %s53
      %s71 = sphi 0, %s71
      %s73 = sphi 0, %s71
      %s74 = sphi 0, %s73
      %s88 = sphi 0, %s74
      %s94 = sphi 0, %s96
      %s97 = sphi 0, %s94
      %s98 = sphi 0, %s97
      %s114 = sphi 0, %s98
    $region4: #{tpu_custom_call.1} parent=1 // loop_header_branch
      %19 = sbr.rel (%p17) target = $region8
    $region5: #{tpu_custom_call.1} parent=1 // loop_body
      %s21 = ssub.s32 %s16, 1
      %s22 = ssub.s32 %s16, 2
      %s23 = sadd.s32 %s16, 1
      %s24 = ssub.s32 %s16, %s23
      %p25 = scmp.eq.s32.totalorder %s24, 0
      %s27 = sadd.s32 %s26, 1
      %s28 = scalar_select %p25, %s26, %s27
      %p31 = pneg %p25
      %p32 = scmp.eq.s32.totalorder %s16, 1
      %p33 = por %p31, %p32
      %p34 = scmp.ne.s32.totalorder %s26, %s29
      %p35 = scmp.eq.s32.totalorder %s16, 0
      %p36 = por %p34, %p35
      %p37 = scmp.ne.s32.totalorder %s26, %s29
      %p38 = scmp.eq.s32.totalorder %s21, 1
      %p39 = por %p37, %p38
      %p40 = scmp.ne.s32.totalorder %s29, %s30
      %p41 = scmp.eq.s32.totalorder %s21, 0
      %p42 = por %p40, %p41
      %p43 = scmp.ne.s32.totalorder %s29, %s30
      %p44 = scmp.eq.s32.totalorder %s22, 1
      %p45 = por %p43, %p44
      %p47 = scmp.ne.s32.totalorder %s30, %s46
      %p48 = scmp.eq.s32.totalorder %s22, 0
      %p49 = por %p47, %p48
      %s51 = sadd.s32 %s50, 1
      %p54 = scmp.eq.s32.totalorder %s16, 1
      %p55 = scmp.ne.s32.totalorder %s50, %s52
      %p56 = scmp.eq.s32.totalorder %s16, 0
      %p57 = por %p55, %p56
      %p58 = scmp.ne.s32.totalorder %s50, %s52
      %p59 = scmp.eq.s32.totalorder %s21, 1
      %p60 = por %p58, %p59
      %p61 = scmp.ne.s32.totalorder %s52, %s53
      %p62 = scmp.eq.s32.totalorder %s21, 0
      %p63 = por %p61, %p62
      %p64 = scmp.ne.s32.totalorder %s52, %s53
      %p65 = scmp.eq.s32.totalorder %s22, 1
      %p66 = por %p64, %p65
      %p68 = scmp.ne.s32.totalorder %s53, %s67
      %p69 = scmp.eq.s32.totalorder %s22, 0
      %p70 = por %p68, %p69
      %s72 = sadd.s32 %s71, 1
      %p75 = scmp.eq.s32.totalorder %s16, 1
      %p76 = scmp.ne.s32.totalorder %s71, %s73
      %p77 = scmp.eq.s32.totalorder %s16, 0
      %p78 = por %p76, %p77
      %p79 = scmp.ne.s32.totalorder %s71, %s73
      %p80 = scmp.eq.s32.totalorder %s21, 1
      %p81 = por %p79, %p80
      %p82 = scmp.ne.s32.totalorder %s73, %s74
      %p83 = scmp.eq.s32.totalorder %s21, 0
      %p84 = por %p82, %p83
      %p85 = scmp.ne.s32.totalorder %s73, %s74
      %p86 = scmp.eq.s32.totalorder %s22, 1
      %p87 = por %p85, %p86
      %p89 = scmp.ne.s32.totalorder %s74, %s88
      %p90 = scmp.eq.s32.totalorder %s22, 0
      %p91 = por %p89, %p90
      %s92 = ssub.s32 %s16, %s23
      %p93 = scmp.eq.s32.totalorder %s92, 0
      %s95 = sadd.s32 %s94, 1
      %s96 = scalar_select %p93, %s94, %s95
      %p99 = pneg %p93
      %p100 = scmp.eq.s32.totalorder %s16, 1
      %p101 = por %p99, %p100
      %p102 = scmp.ne.s32.totalorder %s94, %s97
      %p103 = scmp.eq.s32.totalorder %s16, 0
      %p104 = por %p102, %p103
      %p105 = scmp.ne.s32.totalorder %s94, %s97
      %p106 = scmp.eq.s32.totalorder %s21, 1
      %p107 = por %p105, %p106
      %p108 = scmp.ne.s32.totalorder %s97, %s98
      %p109 = scmp.eq.s32.totalorder %s21, 0
      %p110 = por %p108, %p109
      %p111 = scmp.ne.s32.totalorder %s97, %s98
      %p112 = scmp.eq.s32.totalorder %s22, 1
      %p113 = por %p111, %p112
      %p115 = scmp.ne.s32.totalorder %s98, %s114
      %p116 = scmp.eq.s32.totalorder %s22, 0
      %p117 = por %p115, %p116
      %p118 = scmp.le.s32.totalorder 1, %s16
      %p119 = scmp.lt.s32.totalorder %s16, 3
      %p120 = pnand %p118, %p119
      %p121 = pneg %p120
      // Predicated region
      $region9: #{tpu_custom_call.1} parent=5 // pred_check
        _
      $region10: #{tpu_custom_call.1} parent=5 // pred_check_branch
        %123 = sbr.rel (%p120) target = $region12
      $region11: #{tpu_custom_call.1} parent=5 // pred_region
        %s124 = ssub.s32 %s16, 1
        // Predicated region
        $region13: #{tpu_custom_call.1} parent=11 // pred_check
          %p125 = pneg %p63
        $region14: #{tpu_custom_call.1} parent=11 // pred_check_branch
          %127 = sbr.rel (%p125) target = $region16
        $region15: #{tpu_custom_call.1} parent=11 // pred_region
          %129 = vsyncadd [#allocation7], 0
          %s130 = sshll.u32 %s1, 4
          %s131 = int_to_ptr.hbm [resolvable:$true] %s130
          %s132 = sshll.u32 [#allocation6], 4
          %s133 = int_to_ptr.vmem [resolvable:$true] %s132
          %138 = dma.hbm_to_vmem [thread:$0]  %s131, 512, %s133, [#allocation7], 256, 256, 16
        $region16: #{tpu_custom_call.1} parent=11 // pred_fallthru
          _
        // Predicated region
        $region17: #{tpu_custom_call.1} parent=11 // pred_check
          %p139 = pneg %p84
        $region18: #{tpu_custom_call.1} parent=11 // pred_check_branch
          %141 = sbr.rel (%p139) target = $region20
        $region19: #{tpu_custom_call.1} parent=11 // pred_region
          %143 = vsyncadd [#allocation7], 0
          %s145 = sshll.u32 %s2, 4
          %s146 = int_to_ptr.hbm [resolvable:$true] %s145
          %s147 = sshll.u32 [#allocation8], 4
          %s148 = int_to_ptr.vmem [resolvable:$true] %s147
          %150 = dma.hbm_to_vmem [thread:$0]  %s146, 32, %s148, [#allocation7]
        $region20: #{tpu_custom_call.1} parent=11 // pred_fallthru
          _
      $region12: #{tpu_custom_call.1} parent=5 // pred_fallthru
        _
      %p151 = scmp.lt.s32.totalorder %s16, 2
      // Predicated region
      $region21: #{tpu_custom_call.1} parent=5 // pred_check
        %p152 = pneg %p151
      $region22: #{tpu_custom_call.1} parent=5 // pred_check_branch
        %154 = sbr.rel (%p152) target = $region24
      $region23: #{tpu_custom_call.1} parent=5 // pred_region
        // Predicated region
        $region25: #{tpu_custom_call.1} parent=23 // pred_check
          %p155 = pneg %p36
        $region26: #{tpu_custom_call.1} parent=23 // pred_check_branch
          %157 = sbr.rel (%p155) target = $region28
        $region27: #{tpu_custom_call.1} parent=23 // pred_region
          %s158 = sand.u32 %s26, 1
          %s159 = scalar_lea.sflag [#allocation4], %s158
          %s160 = sand.u32 %s26, 1
          %s161 = smul.addr %s160, 32
          %s162 = scalar_lea.vmem [#allocation3], %s161
          %164 = vsyncadd %s159, 0
          %s165 = smul.addr %s16, 4
          %s166 = smul.addr %s165, 8
          %s167 = scalar_lea.hbm %s0, %s166
          %s168 = sshll.u32 %s167, 4
          %s169 = int_to_ptr.hbm [resolvable:$true] %s168
          %s170 = sshll.u32 %s162, 4
          %s171 = int_to_ptr.vmem [resolvable:$true] %s170
          %176 = dma.hbm_to_vmem [thread:$0]  %s169, 512, %s171, %s159, 256, 256, 16
        $region28: #{tpu_custom_call.1} parent=23 // pred_fallthru
          _
      $region24: #{tpu_custom_call.1} parent=5 // pred_fallthru
        _
      %p177 = scmp.le.s32.totalorder 1, %s16
      %p178 = scmp.lt.s32.totalorder %s16, 3
      %p179 = pnand %p177, %p178
      %p180 = pneg %p179
      // Predicated region
      $region29: #{tpu_custom_call.1} parent=5 // pred_check
        _
      $region30: #{tpu_custom_call.1} parent=5 // pred_check_branch
        %182 = sbr.rel (%p179) target = $region32
      $region31: #{tpu_custom_call.1} parent=5 // pred_region
        %s183 = ssub.s32 %s16, 1
        %s184 = sand.u32 %s29, 1
        %s185 = scalar_lea.sflag [#allocation4], %s184
        %s186 = sand.u32 %s29, 1
        %s187 = smul.addr %s186, 32
        %s188 = scalar_lea.vmem [#allocation3], %s187
        // Predicated region
        $region33: #{tpu_custom_call.1} parent=31 // pred_check
          %p189 = pneg %p42
        $region34: #{tpu_custom_call.1} parent=31 // pred_check_branch
          %191 = sbr.rel (%p189) target = $region36
        $region35: #{tpu_custom_call.1} parent=31 // pred_region
          %193 = dma.done %s185, 512
        $region36: #{tpu_custom_call.1} parent=31 // pred_fallthru
          _
        // Predicated region
        $region37: #{tpu_custom_call.1} parent=31 // pred_check
          %p194 = pneg %p63
        $region38: #{tpu_custom_call.1} parent=31 // pred_check_branch
          %196 = sbr.rel (%p194) target = $region40
        $region39: #{tpu_custom_call.1} parent=31 // pred_region
          %198 = dma.done [#allocation7], 512
        $region40: #{tpu_custom_call.1} parent=31 // pred_fallthru
          _
        // Predicated region
        $region41: #{tpu_custom_call.1} parent=31 // pred_check
          %p199 = pneg %p84
        $region42: #{tpu_custom_call.1} parent=31 // pred_check_branch
          %201 = sbr.rel (%p199) target = $region44
        $region43: #{tpu_custom_call.1} parent=31 // pred_region
          %203 = dma.done [#allocation7], 32
        $region44: #{tpu_custom_call.1} parent=31 // pred_fallthru
          _
        %s204 = sand.u32 %s29, 1
        %s205 = scalar_lea.sflag [#allocation4], %s204
        %s206 = sand.u32 %s29, 1
        %s207 = smul.addr %s206, 32
        %s208 = scalar_lea.vmem [#allocation3], %s207
        %p209 = pneg %p42
        %p210 = pneg %p39
        %p211 = pneg %p63
        %p212 = pneg %p60
        %p213 = pneg %p84
        %p214 = pneg %p81
        %p215 = pneg %p110
        %p216 = pneg %p107
        %s217 = sand.u32 %s97, 1
        %s218 = scalar_lea.sflag [#allocation5], %s217
        %s219 = sand.u32 %s97, 1
        %s220 = smul.addr %s219, 32
        %s221 = scalar_lea.vmem [#allocation9], %s220
        %v222 = vlaneseq
        %vm223 = vcmp.ge.s32.totalorder %v222, 0
        %vm224 = vcmp.lt.s32.totalorder %v222, 256
        %vm225 = vmand %vm223, %vm224
        %226 = vst.msk [vmem:[#allocation2] ss:$8 sm:$0x3] %vm225, 0.0
        %227 = vst.msk [vmem:[#allocation2] ss:$8 sm:$0x0] %vm225, 0.0
        %s228 = scalar_lea.vmem [#allocation2], 33
        %229 = vst.msk [vmem:[%s228] ss:$8 sm:$0x3] %vm225, 0.0
        %230 = vst.msk [vmem:[%s228] ss:$8 sm:$0x0] %vm225, 0.0
        %v231 = vld [vmem:[%s188] sm:$0xff]
        %v232 = vld [vmem:[%s188 + $0x8] sm:$0xff]
        %v233 = vld [vmem:[%s188 + $0x10] sm:$0xff]
        %v234 = vld [vmem:[%s188 + $0x18] sm:$0xff]
        %vm239 = vcmask 1040384
        %v240 = vrot.slane %v231, 7
        %v241 = vrot.slane %v232, 7
        %v242 = vrot.slane %v233, 7
        %v243 = vsel %vm239, %v240, %v242
        %v244 = vrot.slane %v234, 7
        %v245 = vsel %vm239, %v241, %v244
        %252 = vst [vmem:[#allocation2] sm:$0xfe] %v240
        %253 = vst [vmem:[#allocation2 + $0x8] sm:$0xfe] %v241
        %254 = vst [vmem:[#allocation2 + $0x10] sm:$0xff] %v243
        %255 = vst [vmem:[#allocation2 + $0x18] sm:$0xff] %v245
        %256 = vst [vmem:[#allocation2 + $0x20] sm:$0x1] %v242
        %257 = vst [vmem:[#allocation2 + $0x28] sm:$0x1] %v244
        %v258 = vld [vmem:[#allocation6] sm:$0xff]
        %v259 = vld [vmem:[#allocation6 + $0x8] sm:$0xff]
        %v260 = vld [vmem:[#allocation6 + $0x10] sm:$0x1]
        %v261 = vld [vmem:[#allocation6 + $0x18] sm:$0x1]
        %v262 = vld [vmem:[#allocation8] sm:$0x3]
        %v264 = vperm.slane %v262, 0
        %v265 = vperm.slane %v262, 1
        %v268 = vld [vmem:[#allocation2] sm:$0xff]
        %v269 = vld [vmem:[#allocation2 + $0x8] sm:$0xff]
        %v270 = vld [vmem:[#allocation2 + $0x10] sm:$0xff]
        %v271 = vld [vmem:[#allocation2 + $0x18] sm:$0xff]
        %272 = vrot.lane.b32.xlu0 %v268, 16
        %v273 = vpop.permute.xlu0 %272
        %274 = vrot.lane.b32.xlu0 %v270, 16
        %v275 = vpop.permute.xlu0 %274
        %276 = vrot.lane.b32.xlu0 %v269, 16
        %v277 = vpop.permute.xlu0 %276
        %278 = vrot.lane.b32.xlu0 %v271, 16
        %v279 = vpop.permute.xlu0 %278
        %v280 = vlaneseq
        %v281 = vand.u32 %v280, 127
        %vm282 = vcmp.lt.s32.totalorder %v281, 16
        %v283 = vsel %vm282, %v273, %v277
        %v284 = vsel %vm282, %v275, %v279
        %v285 = vsel %vm282, %v277, %v273
        %v286 = vsel %vm282, %v279, %v275
        %v287 = vperm.slane %v258, 0
        %v288 = vperm.slane %v259, 0
        %v289 = vmul.f32 %v285, %v287
        %v290 = vmul.f32 %v283, %v288
        %v291 = vmul.f32 %v286, %v287
        %v292 = vmul.f32 %v284, %v288
        %v293 = vadd.f32 %v264, %v289
        %v294 = vadd.f32 %v265, %v290
        %v295 = vadd.f32 %v264, %v291
        %v296 = vadd.f32 %v265, %v292
        %v297 = vperm.slane %v258, 1
        %v298 = vperm.slane %v259, 1
        %v299 = vmul.f32 %v268, %v297
        %v300 = vmul.f32 %v269, %v298
        %v301 = vmul.f32 %v270, %v297
        %v302 = vmul.f32 %v271, %v298
        %v303 = vadd.f32 %v293, %v299
        %v304 = vadd.f32 %v294, %v300
        %v305 = vadd.f32 %v295, %v301
        %v306 = vadd.f32 %v296, %v302
        %307 = vrot.lane.b32.xlu0 %v268, 112
        %v308 = vpop.permute.xlu0 %307
        %309 = vrot.lane.b32.xlu0 %v270, 112
        %v310 = vpop.permute.xlu0 %309
        %311 = vrot.lane.b32.xlu0 %v269, 112
        %v312 = vpop.permute.xlu0 %311
        %313 = vrot.lane.b32.xlu0 %v271, 112
        %v314 = vpop.permute.xlu0 %313
        %vm315 = vcmp.lt.s32.totalorder %v281, 112
        %v316 = vsel %vm315, %v308, %v312
        %v317 = vsel %vm315, %v310, %v314
        %v318 = vsel %vm315, %v312, %v308
        %v319 = vsel %vm315, %v314, %v310
        %v320 = vperm.slane %v258, 2
        %v321 = vperm.slane %v259, 2
        %v322 = vmul.f32 %v316, %v320
        %v323 = vmul.f32 %v318, %v321
        %v324 = vmul.f32 %v317, %v320
        %v325 = vmul.f32 %v319, %v321
        %v326 = vadd.f32 %v303, %v322
        %v327 = vadd.f32 %v304, %v323
        %v328 = vadd.f32 %v305, %v324
        %v329 = vadd.f32 %v306, %v325
        %v330 = vld [vmem:[#allocation2] sm:$0xfe]
        %v331 = vld [vmem:[#allocation2 + $0x8] sm:$0xfe]
        %v332 = vld [vmem:[#allocation2 + $0x10] sm:$0xff]
        %v333 = vld [vmem:[#allocation2 + $0x18] sm:$0xff]
        %v334 = vld [vmem:[#allocation2 + $0x20] sm:$0x1]
        %v335 = vld [vmem:[#allocation2 + $0x28] sm:$0x1]
        %vm342 = vcmask 1046528
        %v343 = vrot.slane %v330, 1
        %v344 = vrot.slane %v332, 1
        %v345 = vsel %vm342, %v343, %v344
        %v346 = vrot.slane %v331, 1
        %v347 = vrot.slane %v333, 1
        %v348 = vsel %vm342, %v346, %v347
        %v349 = vrot.slane %v334, 1
        %v350 = vsel %vm342, %v344, %v349
        %v351 = vrot.slane %v335, 1
        %v352 = vsel %vm342, %v347, %v351
        %357 = vrot.lane.b32.xlu0 %v345, 16
        %v358 = vpop.permute.xlu0 %357
        %359 = vrot.lane.b32.xlu0 %v350, 16
        %v360 = vpop.permute.xlu0 %359
        %361 = vrot.lane.b32.xlu0 %v348, 16
        %v362 = vpop.permute.xlu0 %361
        %363 = vrot.lane.b32.xlu0 %v352, 16
        %v364 = vpop.permute.xlu0 %363
        %v365 = vsel %vm282, %v358, %v362
        %v366 = vsel %vm282, %v360, %v364
        %v367 = vsel %vm282, %v362, %v358
        %v368 = vsel %vm282, %v364, %v360
        %v369 = vperm.slane %v258, 3
        %v370 = vperm.slane %v259, 3
        %v371 = vmul.f32 %v367, %v369
        %v372 = vmul.f32 %v365, %v370
        %v373 = vmul.f32 %v368, %v369
        %v374 = vmul.f32 %v366, %v370
        %v375 = vadd.f32 %v326, %v371
        %v376 = vadd.f32 %v327, %v372
        %v377 = vadd.f32 %v328, %v373
        %v378 = vadd.f32 %v329, %v374
        %v379 = vperm.slane %v258, 4
        %v380 = vperm.slane %v259, 4
        %v381 = vmul.f32 %v330, %v379
        %v382 = vmul.f32 %v331, %v380
        %v383 = vmul.f32 %v332, %v379
        %v384 = vmul.f32 %v333, %v380
        %v385 = vmul.f32 %v334, %v379
        %v386 = vmul.f32 %v335, %v380
        %v393 = vrot.slane %v381, 1
        %v394 = vrot.slane %v383, 1
        %v395 = vsel %vm342, %v393, %v394
        %v396 = vrot.slane %v382, 1
        %v397 = vrot.slane %v384, 1
        %v398 = vsel %vm342, %v396, %v397
        %v399 = vrot.slane %v385, 1
        %v400 = vsel %vm342, %v394, %v399
        %v401 = vrot.slane %v386, 1
        %v402 = vsel %vm342, %v397, %v401
        %v407 = vadd.f32 %v375, %v395
        %v408 = vadd.f32 %v376, %v398
        %v409 = vadd.f32 %v377, %v400
        %v410 = vadd.f32 %v378, %v402
        %411 = vrot.lane.b32.xlu0 %v345, 112
        %v412 = vpop.permute.xlu0 %411
        %413 = vrot.lane.b32.xlu0 %v350, 112
        %v414 = vpop.permute.xlu0 %413
        %415 = vrot.lane.b32.xlu0 %v348, 112
        %v416 = vpop.permute.xlu0 %415
        %417 = vrot.lane.b32.xlu0 %v352, 112
        %v418 = vpop.permute.xlu0 %417
        %v419 = vsel %vm315, %v412, %v416
        %v420 = vsel %vm315, %v414, %v418
        %v421 = vsel %vm315, %v416, %v412
        %v422 = vsel %vm315, %v418, %v414
        %v423 = vperm.slane %v258, 5
        %v424 = vperm.slane %v259, 5
        %v425 = vmul.f32 %v419, %v423
        %v426 = vmul.f32 %v421, %v424
        %v427 = vmul.f32 %v420, %v423
        %v428 = vmul.f32 %v422, %v424
        %v429 = vadd.f32 %v407, %v425
        %v430 = vadd.f32 %v408, %v426
        %v431 = vadd.f32 %v409, %v427
        %v432 = vadd.f32 %v410, %v428
        %v433 = vld [vmem:[#allocation2] sm:$0xfc]
        %v434 = vld [vmem:[#allocation2 + $0x8] sm:$0xfc]
        %v435 = vld [vmem:[#allocation2 + $0x20] sm:$0x3]
        %v436 = vld [vmem:[#allocation2 + $0x28] sm:$0x3]
        %vm441 = vcmask 1045504
        %v442 = vrot.slane %v433, 2
        %v443 = vrot.slane %v332, 2
        %v444 = vsel %vm441, %v442, %v443
        %v445 = vrot.slane %v434, 2
        %v446 = vrot.slane %v333, 2
        %v447 = vsel %vm441, %v445, %v446
        %v448 = vrot.slane %v435, 2
        %v449 = vsel %vm441, %v443, %v448
        %v450 = vrot.slane %v436, 2
        %v451 = vsel %vm441, %v446, %v450
        %456 = vrot.lane.b32.xlu0 %v444, 16
        %v457 = vpop.permute.xlu0 %456
        %458 = vrot.lane.b32.xlu0 %v449, 16
        %v459 = vpop.permute.xlu0 %458
        %460 = vrot.lane.b32.xlu0 %v447, 16
        %v461 = vpop.permute.xlu0 %460
        %462 = vrot.lane.b32.xlu0 %v451, 16
        %v463 = vpop.permute.xlu0 %462
        %v464 = vsel %vm282, %v457, %v461
        %v465 = vsel %vm282, %v459, %v463
        %v466 = vsel %vm282, %v461, %v457
        %v467 = vsel %vm282, %v463, %v459
        %v468 = vperm.slane %v258, 6
        %v469 = vperm.slane %v259, 6
        %v470 = vmul.f32 %v466, %v468
        %v471 = vmul.f32 %v464, %v469
        %v472 = vmul.f32 %v467, %v468
        %v473 = vmul.f32 %v465, %v469
        %v474 = vadd.f32 %v429, %v470
        %v475 = vadd.f32 %v430, %v471
        %v476 = vadd.f32 %v431, %v472
        %v477 = vadd.f32 %v432, %v473
        %v478 = vperm.slane %v258, 7
        %v479 = vperm.slane %v259, 7
        %v480 = vmul.f32 %v433, %v478
        %v481 = vmul.f32 %v434, %v479
        %v482 = vmul.f32 %v332, %v478
        %v483 = vmul.f32 %v333, %v479
        %v484 = vmul.f32 %v435, %v478
        %v485 = vmul.f32 %v436, %v479
        %v492 = vrot.slane %v480, 2
        %v493 = vrot.slane %v482, 2
        %v494 = vsel %vm441, %v492, %v493
        %v495 = vrot.slane %v481, 2
        %v496 = vrot.slane %v483, 2
        %v497 = vsel %vm441, %v495, %v496
        %v498 = vrot.slane %v484, 2
        %v499 = vsel %vm441, %v493, %v498
        %v500 = vrot.slane %v485, 2
        %v501 = vsel %vm441, %v496, %v500
        %v506 = vadd.f32 %v474, %v494
        %v507 = vadd.f32 %v475, %v497
        %v508 = vadd.f32 %v476, %v499
        %v509 = vadd.f32 %v477, %v501
        %510 = vrot.lane.b32.xlu0 %v444, 112
        %v511 = vpop.permute.xlu0 %510
        %512 = vrot.lane.b32.xlu0 %v449, 112
        %v513 = vpop.permute.xlu0 %512
        %514 = vrot.lane.b32.xlu0 %v447, 112
        %v515 = vpop.permute.xlu0 %514
        %516 = vrot.lane.b32.xlu0 %v451, 112
        %v517 = vpop.permute.xlu0 %516
        %v518 = vsel %vm315, %v511, %v515
        %v519 = vsel %vm315, %v513, %v517
        %v520 = vsel %vm315, %v515, %v511
        %v521 = vsel %vm315, %v517, %v513
        %v522 = vperm.slane %v260, 0
        %v523 = vperm.slane %v261, 0
        %v524 = vmul.f32 %v518, %v522
        %v525 = vmul.f32 %v520, %v523
        %v526 = vmul.f32 %v519, %v522
        %v527 = vmul.f32 %v521, %v523
        %v528 = vadd.f32 %v506, %v524
        %v529 = vadd.f32 %v507, %v525
        %v530 = vadd.f32 %v508, %v526
        %v531 = vadd.f32 %v509, %v527
        %532 = vst [vmem:[%s221] sm:$0xff] %v528
        %533 = vst [vmem:[%s221 + $0x8] sm:$0xff] %v529
        %534 = vst [vmem:[%s221 + $0x10] sm:$0xff] %v530
        %535 = vst [vmem:[%s221 + $0x18] sm:$0xff] %v531
        %s536 = sand.u32 %s97, 1
        %s537 = scalar_lea.sflag [#allocation5], %s536
        %s538 = sand.u32 %s97, 1
        %s539 = smul.addr %s538, 32
        %s540 = scalar_lea.vmem [#allocation9], %s539
        // Predicated region
        $region45: #{tpu_custom_call.1} parent=31 // pred_check
          %p541 = pneg %p107
        $region46: #{tpu_custom_call.1} parent=31 // pred_check_branch
          %543 = sbr.rel (%p541) target = $region48
        $region47: #{tpu_custom_call.1} parent=31 // pred_region
          %545 = vsyncadd %s537, 0
          %s546 = smul.addr %s21, 4
          %s547 = smul.addr %s546, 8
          %s548 = scalar_lea.hbm %s3, %s547
          %s549 = sshll.u32 %s540, 4
          %s550 = int_to_ptr.vmem [resolvable:$true] %s549
          %s551 = sshll.u32 %s548, 4
          %s552 = int_to_ptr.hbm [resolvable:$true] %s551
          %557 = dma.vmem_to_hbm [thread:$0]  %s550, 512, %s552, %s537, 256, 256, 16
        $region48: #{tpu_custom_call.1} parent=31 // pred_fallthru
          _
      $region32: #{tpu_custom_call.1} parent=5 // pred_fallthru
        _
      %p558 = scmp.le.s32.totalorder 2, %s16
      // Predicated region
      $region49: #{tpu_custom_call.1} parent=5 // pred_check
        %p559 = pneg %p558
      $region50: #{tpu_custom_call.1} parent=5 // pred_check_branch
        %561 = sbr.rel (%p559) target = $region52
      $region51: #{tpu_custom_call.1} parent=5 // pred_region
        %s562 = ssub.s32 %s16, 2
        // Predicated region
        $region53: #{tpu_custom_call.1} parent=51 // pred_check
          %p563 = pneg %p113
        $region54: #{tpu_custom_call.1} parent=51 // pred_check_branch
          %565 = sbr.rel (%p563) target = $region56
        $region55: #{tpu_custom_call.1} parent=51 // pred_region
          %s566 = sand.u32 %s98, 1
          %s567 = scalar_lea.sflag [#allocation5], %s566
          %s568 = sand.u32 %s98, 1
          %s569 = smul.addr %s568, 32
          %s570 = scalar_lea.vmem [#allocation9], %s569
          %572 = dma.done %s567, 512
        $region56: #{tpu_custom_call.1} parent=51 // pred_fallthru
          _
      $region52: #{tpu_custom_call.1} parent=5 // pred_fallthru
        _
    $region6: #{tpu_custom_call.1} parent=1 // loop_footer
      %s20 = sadd.s32 1, %s16
    $region7: #{tpu_custom_call.1} parent=1 // loop_footer_branch
      %15 = sbr.rel target = $region3
    $region8: #{tpu_custom_call.1} parent=1 // loop_exit
      _
    %573 = vsyncpa [#allocation4], 1
    %s574 = scalar_lea.sflag [#allocation4], 1
    %575 = vsyncpa %s574, 1
    %576 = vsyncpa [#allocation7], 1
    %577 = vsyncpa [#allocation5], 1
    %s578 = scalar_lea.sflag [#allocation5], 1
    %579 = vsyncpa %s578, 1

</llo_original>
